<compile_context>
chip_gen: v5e
topology: v5e:2x2
jax: 0.10.0
libtpu: 0.0.40
codegen_flags: <defaults>
</compile_context>

<pallas_src>
import jax
import jax.numpy as jnp
from jax.experimental import pallas as pl
from jax.experimental.pallas import tpu as pltpu

_LANE = 128      # vreg lane width
_SUBLANE = 8     # vreg sublane count (f32)


def _round_up(n, m):
    return ((n + m - 1) // m) * m


def _cdiv(a, b):
    return -(-a // b)


def cluster_model_kernel(x_ref,
                         w1_ref, b1_ref,
                         w2_ref, b2_ref,
                         w3_ref, b3_ref,
                         w4_ref, b4_ref,
                         o_ref):
    # x tile:   [TM, in_dim]   f32 (streamed + double-buffered by Pallas)
    # weights:  bf16, whole-array VMEM residents (single copy, no pipelining)
    # biases:   [1, out_pad]   f32
    # MXU operands are bf16 with f32 accumulation; bias + ReLU stay in f32 on
    # the VPU (v5e has no bf16 elementwise path).
    x = x_ref[...].astype(jnp.bfloat16)
    h = jnp.dot(x, w1_ref[...], preferred_element_type=jnp.float32)
    h = jnp.maximum(h + b1_ref[...], 0.0)

    h = jnp.dot(h.astype(jnp.bfloat16), w2_ref[...],
                preferred_element_type=jnp.float32)
    h = jnp.maximum(h + b2_ref[...], 0.0)

    h = jnp.dot(h.astype(jnp.bfloat16), w3_ref[...],
                preferred_element_type=jnp.float32)
    h = jnp.maximum(h + b3_ref[...], 0.0)

    y = jnp.dot(h.astype(jnp.bfloat16), w4_ref[...],
                preferred_element_type=jnp.float32)
    # Lane-dense (multiple-of-128) unmasked f32 store.
    o_ref[...] = y + b4_ref[...]


def prepare_params(params):
    """One-time padding/cast of weights & biases (hoisted out of the forward).

    W1 keeps its true K (= in_dim) so x can be fed un-padded; every layer's
    output dim is zero-padded to a multiple of 128 lanes.  Zero padding is
    exact: padded output columns stay 0 through bias+ReLU and the padded K
    rows of the next layer only ever multiply those zeros.
    """
    in_dim = params["w1"].shape[0]
    n_classes = params["w4"].shape[1]
    ws, bs = [], []
    k = in_dim
    for i in range(1, 5):
        w = params[f"w{i}"]
        b = params[f"b{i}"]
        din, dout = w.shape
        n_pad = _round_up(dout, _LANE)
        wp = jnp.zeros((k, n_pad), jnp.bfloat16)
        wp = wp.at[:din, :dout].set(w.astype(jnp.bfloat16))
        bp = jnp.zeros((1, n_pad), jnp.float32)
        bp = bp.at[:, :dout].set(b.astype(jnp.float32))
        ws.append(wp)
        bs.append(bp)
        k = n_pad
    return {"ws": ws, "bs": bs, "in_dim": in_dim, "n_classes": n_classes}


def cluster_model_forward(x, prepared, *, tm=512):
    """x: [B, in_dim] float32; prepared: output of prepare_params().

    tm: upper bound on the batch tile; 512 is a good default everywhere,
    raise to 1024 on v5e/v6e (128 MiB VMEM) for very large batches.
    """
    B, in_dim = x.shape
    assert in_dim == prepared["in_dim"]
    ws, bs = prepared["ws"], prepared["bs"]
    n_classes = prepared["n_classes"]
    out_pad = ws[3].shape[1]

    # Balanced batch tiles; force >=2 grid steps whenever B is big enough so
    # the "parallel" axis can shard over v7x's two TensorCores and the x/out
    # DMA pipeline has something to overlap with.
    n_tiles = max(2, _cdiv(B, tm)) if B > _SUBLANE else 1
    tm_eff = _round_up(_cdiv(B, n_tiles), _SUBLANE)
    b_pad = n_tiles * tm_eff
    xp = x if b_pad == B else jnp.pad(x, ((0, b_pad - B), (0, 0)))

    # VMEM budget: single-copy weights/biases + double-buffered x/out tiles
    # + in-kernel activation temps; x2 margin, capped at 48 MiB (safe on v7x).
    weight_bytes = sum(int(w.size) * 2 for w in ws) + sum(int(b.size) * 4 for b in bs)
    stream_bytes = 2 * tm_eff * in_dim * 4 + 2 * tm_eff * out_pad * 4
    act_bytes = tm_eff * sum(int(w.shape[1]) for w in ws) * 6   # f32 + bf16 temps
    vmem_limit = int(min(48 * 1024 * 1024,
                         max(32 * 1024 * 1024,
                             2 * (weight_bytes + stream_bytes + act_bytes))))

    resident = pl.BlockSpec(memory_space=pltpu.MemorySpace.VMEM)

    out = pl.pallas_call(
        cluster_model_kernel,
        out_shape=jax.ShapeDtypeStruct((b_pad, out_pad), jnp.float32),
        grid=(n_tiles,),
        in_specs=[pl.BlockSpec((tm_eff, in_dim), lambda i: (i, 0))]
                 + [resident] * 8,
        out_specs=pl.BlockSpec((tm_eff, out_pad), lambda i: (i, 0)),
        compiler_params=pltpu.CompilerParams(
            dimension_semantics=("parallel",),
            vmem_limit_bytes=vmem_limit),
    )(xp, ws[0], bs[0], ws[1], bs[1], ws[2], bs[2], ws[3], bs[3])

    # Padded batch rows / output columns are sliced away (they hold ReLU(bias)
    # garbage and zero logit columns respectively).
    return out[:B, :n_classes]


def init_params(key, in_dim, lat_dim, n_classes):
    """Deterministic PyTorch-Linear-style init (uniform +/- 1/sqrt(fan_in))."""
    dims = [(in_dim, in_dim // 4),
            (in_dim // 4, in_dim // 8),
            (in_dim // 8, lat_dim),
            (lat_dim, n_classes)]
    params = {}
    for i, (din, dout) in enumerate(dims, start=1):
        key, kw, kb = jax.random.split(key, 3)
        bound = 1.0 / (din ** 0.5)
        # stored as [in, out] (transposed vs torch's [out, in]); math identical
        params[f"w{i}"] = jax.random.uniform(kw, (din, dout), jnp.float32,
                                             minval=-bound, maxval=bound)
        params[f"b{i}"] = jax.random.uniform(kb, (1, dout), jnp.float32,
                                             minval=-bound, maxval=bound)
    return params


def reference_forward_f32(x, params):
    h = jnp.maximum(x @ params["w1"] + params["b1"], 0.0)
    h = jnp.maximum(h @ params["w2"] + params["b2"], 0.0)
    h = jnp.maximum(h @ params["w3"] + params["b3"], 0.0)
    return h @ params["w4"] + params["b4"]


def reference_forward_bf16(x, params):
    """Mirrors the kernel numerics: bf16 MXU operands, f32 accumulation/elementwise."""
    def lin(h, w, b):
        return jnp.dot(h.astype(jnp.bfloat16), w.astype(jnp.bfloat16),
                       preferred_element_type=jnp.float32) + b
    h = jnp.maximum(lin(x, params["w1"], params["b1"]), 0.0)
    h = jnp.maximum(lin(h, params["w2"], params["b2"]), 0.0)
    h = jnp.maximum(lin(h, params["w3"], params["b3"]), 0.0)
    return lin(h, params["w4"], params["b4"])


if __name__ == "__main__":
    # Small shapes consistent with the module:
    # ClusterModel(in_dim=64, lat_dim=32, n_classes=16, block_level=0)
    B, IN_DIM, LAT_DIM, N_CLASSES = 8, 64, 32, 16

    key = jax.random.PRNGKey(0)
    key, kx = jax.random.split(key)
    x = jax.random.normal(kx, (B, IN_DIM), jnp.float32)
    params = init_params(key, IN_DIM, LAT_DIM, N_CLASSES)

    prepared = prepare_params(params)          # one-time weight pad/cast
    out = jax.block_until_ready(cluster_model_forward(x, prepared))
    assert out.shape == (B, N_CLASSES)

    # Tight check vs a reference with identical numerics (bf16 operands, f32 accum).
    ref_bf16 = reference_forward_bf16(x, params)
    assert jnp.allclose(out, ref_bf16, atol=2e-3, rtol=2e-3), \
        "mismatch vs bf16-operand reference"

    # Loose sanity check vs the full-f32 PyTorch-equivalent forward.
    ref_f32 = reference_forward_f32(x, params)
    assert jnp.allclose(out, ref_f32, atol=5e-2, rtol=5e-2), \
        "mismatch vs f32 reference"

    print("KERNEL_OK")
</pallas_src>

<mosaic_0001>
module attributes {stable_mosaic.version = 11 : i64} {
  func.func @cluster_model_kernel(%arg0: i32, %arg1: memref<8x64xf32, #tpu.memory_space<vmem>>, %arg2: memref<64x128xbf16, #tpu.memory_space<vmem>>, %arg3: memref<1x128xf32, #tpu.memory_space<vmem>>, %arg4: memref<128x128xbf16, #tpu.memory_space<vmem>>, %arg5: memref<1x128xf32, #tpu.memory_space<vmem>>, %arg6: memref<128x128xbf16, #tpu.memory_space<vmem>>, %arg7: memref<1x128xf32, #tpu.memory_space<vmem>>, %arg8: memref<128x128xbf16, #tpu.memory_space<vmem>>, %arg9: memref<1x128xf32, #tpu.memory_space<vmem>>, %arg10: memref<8x128xf32, #tpu.memory_space<vmem>>) attributes {dimension_semantics = [#tpu.dimension_semantics<parallel>], iteration_bounds = array<i64: 1>, scalar_prefetch = 0 : i64, scratch_operands = 0 : i64, tpu.core_type = #tpu.core_type<tc>, window_params = [{transform_indices = @transform_0, window_bounds = array<i64: 8, 64>}, {pipeline_mode = #tpu.pipeline_mode<synchronous>, transform_indices = @transform_1, window_bounds = array<i64: 64, 128>}, {pipeline_mode = #tpu.pipeline_mode<synchronous>, transform_indices = @transform_2, window_bounds = array<i64: 1, 128>}, {pipeline_mode = #tpu.pipeline_mode<synchronous>, transform_indices = @transform_3, window_bounds = array<i64: 128, 128>}, {pipeline_mode = #tpu.pipeline_mode<synchronous>, transform_indices = @transform_4, window_bounds = array<i64: 1, 128>}, {pipeline_mode = #tpu.pipeline_mode<synchronous>, transform_indices = @transform_5, window_bounds = array<i64: 128, 128>}, {pipeline_mode = #tpu.pipeline_mode<synchronous>, transform_indices = @transform_6, window_bounds = array<i64: 1, 128>}, {pipeline_mode = #tpu.pipeline_mode<synchronous>, transform_indices = @transform_7, window_bounds = array<i64: 128, 128>}, {pipeline_mode = #tpu.pipeline_mode<synchronous>, transform_indices = @transform_8, window_bounds = array<i64: 1, 128>}, {transform_indices = @transform_9, window_bounds = array<i64: 8, 128>}]} {
    %c0 = arith.constant 0 : index
    %c0_0 = arith.constant 0 : index
    %0 = vector.load %arg1[%c0, %c0_0] : memref<8x64xf32, #tpu.memory_space<vmem>>, vector<8x64xf32>
    %1 = arith.truncf %0 : vector<8x64xf32> to vector<8x64xbf16>
    %c0_1 = arith.constant 0 : index
    %c0_2 = arith.constant 0 : index
    %2 = vector.load %arg2[%c0_1, %c0_2] : memref<64x128xbf16, #tpu.memory_space<vmem>>, vector<64x128xbf16>
    %cst = arith.constant dense<0.000000e+00> : vector<8x128xf32>
    %3 = tpu.matmul %1, %2, %cst {dimension_numbers = #tpu.dot_dimension_numbers<[1], [0], [0], [1], [0, 0, 1, 1], [], []>} : vector<8x64xbf16>, vector<64x128xbf16>, vector<8x128xf32> -> vector<8x128xf32>
    %c0_3 = arith.constant 0 : index
    %c0_4 = arith.constant 0 : index
    %4 = vector.load %arg3[%c0_3, %c0_4] : memref<1x128xf32, #tpu.memory_space<vmem>>, vector<1x128xf32>
    %5 = vector.broadcast %4 : vector<1x128xf32> to vector<8x128xf32>
    %6 = arith.addf %3, %5 : vector<8x128xf32>
    %cst_5 = arith.constant 0.000000e+00 : f32
    %7 = vector.broadcast %cst_5 : f32 to vector<8x128xf32>
    %8 = arith.maximumf %6, %7 : vector<8x128xf32>
    %9 = arith.truncf %8 : vector<8x128xf32> to vector<8x128xbf16>
    %c0_6 = arith.constant 0 : index
    %c0_7 = arith.constant 0 : index
    %10 = vector.load %arg4[%c0_6, %c0_7] : memref<128x128xbf16, #tpu.memory_space<vmem>>, vector<128x128xbf16>
    %cst_8 = arith.constant dense<0.000000e+00> : vector<8x128xf32>
    %11 = tpu.matmul %9, %10, %cst_8 {dimension_numbers = #tpu.dot_dimension_numbers<[1], [0], [0], [1], [0, 0, 1, 1], [], []>} : vector<8x128xbf16>, vector<128x128xbf16>, vector<8x128xf32> -> vector<8x128xf32>
    %c0_9 = arith.constant 0 : index
    %c0_10 = arith.constant 0 : index
    %12 = vector.load %arg5[%c0_9, %c0_10] : memref<1x128xf32, #tpu.memory_space<vmem>>, vector<1x128xf32>
    %13 = vector.broadcast %12 : vector<1x128xf32> to vector<8x128xf32>
    %14 = arith.addf %11, %13 : vector<8x128xf32>
    %cst_11 = arith.constant 0.000000e+00 : f32
    %15 = vector.broadcast %cst_11 : f32 to vector<8x128xf32>
    %16 = arith.maximumf %14, %15 : vector<8x128xf32>
    %17 = arith.truncf %16 : vector<8x128xf32> to vector<8x128xbf16>
    %c0_12 = arith.constant 0 : index
    %c0_13 = arith.constant 0 : index
    %18 = vector.load %arg6[%c0_12, %c0_13] : memref<128x128xbf16, #tpu.memory_space<vmem>>, vector<128x128xbf16>
    %cst_14 = arith.constant dense<0.000000e+00> : vector<8x128xf32>
    %19 = tpu.matmul %17, %18, %cst_14 {dimension_numbers = #tpu.dot_dimension_numbers<[1], [0], [0], [1], [0, 0, 1, 1], [], []>} : vector<8x128xbf16>, vector<128x128xbf16>, vector<8x128xf32> -> vector<8x128xf32>
    %c0_15 = arith.constant 0 : index
    %c0_16 = arith.constant 0 : index
    %20 = vector.load %arg7[%c0_15, %c0_16] : memref<1x128xf32, #tpu.memory_space<vmem>>, vector<1x128xf32>
    %21 = vector.broadcast %20 : vector<1x128xf32> to vector<8x128xf32>
    %22 = arith.addf %19, %21 : vector<8x128xf32>
    %cst_17 = arith.constant 0.000000e+00 : f32
    %23 = vector.broadcast %cst_17 : f32 to vector<8x128xf32>
    %24 = arith.maximumf %22, %23 : vector<8x128xf32>
    %25 = arith.truncf %24 : vector<8x128xf32> to vector<8x128xbf16>
    %c0_18 = arith.constant 0 : index
    %c0_19 = arith.constant 0 : index
    %26 = vector.load %arg8[%c0_18, %c0_19] : memref<128x128xbf16, #tpu.memory_space<vmem>>, vector<128x128xbf16>
    %cst_20 = arith.constant dense<0.000000e+00> : vector<8x128xf32>
    %27 = tpu.matmul %25, %26, %cst_20 {dimension_numbers = #tpu.dot_dimension_numbers<[1], [0], [0], [1], [0, 0, 1, 1], [], []>} : vector<8x128xbf16>, vector<128x128xbf16>, vector<8x128xf32> -> vector<8x128xf32>
    %c0_21 = arith.constant 0 : index
    %c0_22 = arith.constant 0 : index
    %28 = vector.load %arg9[%c0_21, %c0_22] : memref<1x128xf32, #tpu.memory_space<vmem>>, vector<1x128xf32>
    %29 = vector.broadcast %28 : vector<1x128xf32> to vector<8x128xf32>
    %30 = arith.addf %27, %29 : vector<8x128xf32>
    %c0_23 = arith.constant 0 : index
    %c0_24 = arith.constant 0 : index
    %31 = vector.load %arg10[%c0_23, %c0_24] : memref<8x128xf32, #tpu.memory_space<vmem>>, vector<8x128xf32>
    tpu.vector_store %arg10[%c0_23, %c0_24], %30 {strides = array<i32>} : memref<8x128xf32, #tpu.memory_space<vmem>>, vector<8x128xf32>,
    return
  }
  func.func @transform_0(%arg0: i32) -> (i32, i32) {
    %c0_i32 = arith.constant 0 : i32
    %c0_i32_0 = arith.constant 0 : i32
    return %arg0, %c0_i32 : i32, i32
  }
  func.func @transform_1(%arg0: i32) -> (i32, i32) {
    %c0_i32 = arith.constant 0 : i32
    %c0_i32_0 = arith.constant 0 : i32
    %c0_i32_1 = arith.constant 0 : i32
    return %c0_i32, %c0_i32_0 : i32, i32
  }
  func.func @transform_2(%arg0: i32) -> (i32, i32) {
    %c0_i32 = arith.constant 0 : i32
    %c0_i32_0 = arith.constant 0 : i32
    %c0_i32_1 = arith.constant 0 : i32
    return %c0_i32, %c0_i32_0 : i32, i32
  }
  func.func @transform_3(%arg0: i32) -> (i32, i32) {
    %c0_i32 = arith.constant 0 : i32
    %c0_i32_0 = arith.constant 0 : i32
    %c0_i32_1 = arith.constant 0 : i32
    return %c0_i32, %c0_i32_0 : i32, i32
  }
  func.func @transform_4(%arg0: i32) -> (i32, i32) {
    %c0_i32 = arith.constant 0 : i32
    %c0_i32_0 = arith.constant 0 : i32
    %c0_i32_1 = arith.constant 0 : i32
    return %c0_i32, %c0_i32_0 : i32, i32
  }
  func.func @transform_5(%arg0: i32) -> (i32, i32) {
    %c0_i32 = arith.constant 0 : i32
    %c0_i32_0 = arith.constant 0 : i32
    %c0_i32_1 = arith.constant 0 : i32
    return %c0_i32, %c0_i32_0 : i32, i32
  }
  func.func @transform_6(%arg0: i32) -> (i32, i32) {
    %c0_i32 = arith.constant 0 : i32
    %c0_i32_0 = arith.constant 0 : i32
    %c0_i32_1 = arith.constant 0 : i32
    return %c0_i32, %c0_i32_0 : i32, i32
  }
  func.func @transform_7(%arg0: i32) -> (i32, i32) {
    %c0_i32 = arith.constant 0 : i32
    %c0_i32_0 = arith.constant 0 : i32
    %c0_i32_1 = arith.constant 0 : i32
    return %c0_i32, %c0_i32_0 : i32, i32
  }
  func.func @transform_8(%arg0: i32) -> (i32, i32) {
    %c0_i32 = arith.constant 0 : i32
    %c0_i32_0 = arith.constant 0 : i32
    %c0_i32_1 = arith.constant 0 : i32
    return %c0_i32, %c0_i32_0 : i32, i32
  }
  func.func @transform_9(%arg0: i32) -> (i32, i32) {
    %c0_i32 = arith.constant 0 : i32
    %c0_i32_0 = arith.constant 0 : i32
    return %arg0, %c0_i32 : i32, i32
  }
}

</mosaic_0001>

<llo_original>
// kernel: tpu_custom_call.1
$region0: #{tpu_custom_call.1}
  #allocation0 [shape = 'u32[]', space=smem, size = 0x4, offset = 0x4, fixed_abs, tag = 'smem constant byte address 0x4 - core index']
  #allocation1 [shape = 'u32[72,128]{1,0:T(1,128)}', space=vmem, size = 0x9000, scoped, tag = 'internal scratch']
  %s0 = inlined_call_operand.hbm [shape: f32[8,64], index: 0, kind: input, shape index: {}]
  %s1 = inlined_call_operand.hbm [shape: bf16[64,128], index: 1, kind: input, shape index: {}]
  %s2 = inlined_call_operand.vmem [shape: f32[1,128], index: 2, kind: input, shape index: {}]
  %s3 = inlined_call_operand.hbm [shape: bf16[128,128], index: 3, kind: input, shape index: {}]
  %s4 = inlined_call_operand.vmem [shape: f32[1,128], index: 4, kind: input, shape index: {}]
  %s5 = inlined_call_operand.hbm [shape: bf16[128,128], index: 5, kind: input, shape index: {}]
  %s6 = inlined_call_operand.vmem [shape: f32[1,128], index: 6, kind: input, shape index: {}]
  %s7 = inlined_call_operand.hbm [shape: bf16[128,128], index: 7, kind: input, shape index: {}]
  %s8 = inlined_call_operand.vmem [shape: f32[1,128], index: 8, kind: input, shape index: {}]
  %s9 = inlined_call_operand.hbm [shape: f32[8,128], index: 9, kind: output, shape index: {}]
  %s10 = sld [smem:[#allocation0]]
  $region66: #{tpu_custom_call.1} parent=0
    _
  %s12 = ssub.s32 1, %s10
  %s13 = scalar_select 0, %s12, %s10
  $region1: #{tpu_custom_call.1} parent=0
    #allocation2 [shape = 'u8[4096]{0}', space=vmem, size = 0x1000, scoped, tag = 'input window, operand 0, single buffered']
    #allocation3 [shape = 's32[1]{0}', space=sflag, size = 0x4, scoped, tag = 'scoped memory for tpu_custom_call.1']
    #allocation4 [shape = 's32[1]{0}', space=sflag, size = 0x4, scoped, tag = 'scoped memory for tpu_custom_call.1']
    #allocation5 [shape = 'u8[16384]{0}', space=vmem, size = 0x4000, scoped, tag = 'input window, operand 1, single buffered']
    #allocation6 [shape = 's32[1]{0}', space=sflag, size = 0x4, scoped, tag = 'scoped memory for tpu_custom_call.1']
    #allocation7 [shape = 'u8[32768]{0}', space=vmem, size = 0x8000, scoped, tag = 'input window, operand 3, single buffered']
    #allocation8 [shape = 'u8[32768]{0}', space=vmem, size = 0x8000, scoped, tag = 'input window, operand 5, single buffered']
    #allocation9 [shape = 's32[1]{0}', space=sflag, size = 0x4, scoped, tag = 'scoped memory for tpu_custom_call.1']
    #allocation10 [shape = 'u8[32768]{0}', space=vmem, size = 0x8000, scoped, tag = 'input window, operand 7, single buffered']
    #allocation11 [shape = 'u8[4096]{0}', space=vmem, size = 0x1000, scoped, tag = 'output window, operand 0, single buffered']
    %14 = vsyncpa [#allocation3], 0
    %15 = vsyncpa [#allocation6], 0
    %16 = vsyncpa [#allocation9], 0
    %17 = vsyncpa [#allocation4], 0
    // Predicated region
    $region2: #{tpu_custom_call.1} parent=1 // pred_check
      _
    $region3: #{tpu_custom_call.1} parent=1 // pred_check_branch
      %19 = sbr.rel (0) target = $region5
    $region4: #{tpu_custom_call.1} parent=1 // pred_region
      %21 = vsyncadd [#allocation3], 0
      %s23 = sshll.u32 %s0, 4
      %s24 = int_to_ptr.hbm [resolvable:$true] %s23
      %s25 = sshll.u32 [#allocation2], 4
      %s26 = int_to_ptr.vmem [resolvable:$true] %s25
      %28 = dma.hbm_to_vmem [thread:$0]  %s24, 128, %s26, [#allocation3]
    $region5: #{tpu_custom_call.1} parent=1 // pred_fallthru
      _
    // Predicated region
    $region6: #{tpu_custom_call.1} parent=1 // pred_check
      _
    $region7: #{tpu_custom_call.1} parent=1 // pred_check_branch
      %30 = sbr.rel (0) target = $region9
    $region8: #{tpu_custom_call.1} parent=1 // pred_region
      %32 = vsyncadd [#allocation6], 0
      %s33 = sshll.u32 %s1, 4
      %s34 = int_to_ptr.hbm [resolvable:$true] %s33
      %s35 = sshll.u32 [#allocation5], 4
      %s36 = int_to_ptr.vmem [resolvable:$true] %s35
      %41 = dma.hbm_to_vmem [thread:$0]  %s34, 512, %s36, [#allocation6], 64, 64, 4
    $region9: #{tpu_custom_call.1} parent=1 // pred_fallthru
      _
    // Predicated region
    $region10: #{tpu_custom_call.1} parent=1 // pred_check
      _
    $region11: #{tpu_custom_call.1} parent=1 // pred_check_branch
      %43 = sbr.rel (0) target = $region13
    $region12: #{tpu_custom_call.1} parent=1 // pred_region
      _
    $region13: #{tpu_custom_call.1} parent=1 // pred_fallthru
      _
    // Predicated region
    $region14: #{tpu_custom_call.1} parent=1 // pred_check
      _
    $region15: #{tpu_custom_call.1} parent=1 // pred_check_branch
      %45 = sbr.rel (0) target = $region17
    $region16: #{tpu_custom_call.1} parent=1 // pred_region
      %47 = vsyncadd [#allocation6], 0
      %s48 = sshll.u32 %s3, 4
      %s49 = int_to_ptr.hbm [resolvable:$true] %s48
      %s50 = sshll.u32 [#allocation7], 4
      %s51 = int_to_ptr.vmem [resolvable:$true] %s50
      %56 = dma.hbm_to_vmem [thread:$0]  %s49, 1024, %s51, [#allocation6], 64, 64, 4
    $region17: #{tpu_custom_call.1} parent=1 // pred_fallthru
      _
    // Predicated region
    $region18: #{tpu_custom_call.1} parent=1 // pred_check
      _
    $region19: #{tpu_custom_call.1} parent=1 // pred_check_branch
      %58 = sbr.rel (0) target = $region21
    $region20: #{tpu_custom_call.1} parent=1 // pred_region
      _
    $region21: #{tpu_custom_call.1} parent=1 // pred_fallthru
      _
    // Predicated region
    $region22: #{tpu_custom_call.1} parent=1 // pred_check
      _
    $region23: #{tpu_custom_call.1} parent=1 // pred_check_branch
      %60 = sbr.rel (0) target = $region25
    $region24: #{tpu_custom_call.1} parent=1 // pred_region
      %62 = vsyncadd [#allocation9], 0
      %s63 = sshll.u32 %s5, 4
      %s64 = int_to_ptr.hbm [resolvable:$true] %s63
      %s65 = sshll.u32 [#allocation8], 4
      %s66 = int_to_ptr.vmem [resolvable:$true] %s65
      %71 = dma.hbm_to_vmem [thread:$0]  %s64, 1024, %s66, [#allocation9], 64, 64, 4
    $region25: #{tpu_custom_call.1} parent=1 // pred_fallthru
      _
    // Predicated region
    $region26: #{tpu_custom_call.1} parent=1 // pred_check
      _
    $region27: #{tpu_custom_call.1} parent=1 // pred_check_branch
      %73 = sbr.rel (0) target = $region29
    $region28: #{tpu_custom_call.1} parent=1 // pred_region
      _
    $region29: #{tpu_custom_call.1} parent=1 // pred_fallthru
      _
    // Predicated region
    $region30: #{tpu_custom_call.1} parent=1 // pred_check
      _
    $region31: #{tpu_custom_call.1} parent=1 // pred_check_branch
      %75 = sbr.rel (0) target = $region33
    $region32: #{tpu_custom_call.1} parent=1 // pred_region
      %77 = vsyncadd [#allocation9], 0
      %s78 = sshll.u32 %s7, 4
      %s79 = int_to_ptr.hbm [resolvable:$true] %s78
      %s80 = sshll.u32 [#allocation10], 4
      %s81 = int_to_ptr.vmem [resolvable:$true] %s80
      %86 = dma.hbm_to_vmem [thread:$0]  %s79, 1024, %s81, [#allocation9], 64, 64, 4
    $region33: #{tpu_custom_call.1} parent=1 // pred_fallthru
      _
    // Predicated region
    $region34: #{tpu_custom_call.1} parent=1 // pred_check
      _
    $region35: #{tpu_custom_call.1} parent=1 // pred_check_branch
      %88 = sbr.rel (0) target = $region37
    $region36: #{tpu_custom_call.1} parent=1 // pred_region
      _
    $region37: #{tpu_custom_call.1} parent=1 // pred_fallthru
      _
    // Predicated region
    $region38: #{tpu_custom_call.1} parent=1 // pred_check
      _
    $region39: #{tpu_custom_call.1} parent=1 // pred_check_branch
      %90 = sbr.rel (0) target = $region41
    $region40: #{tpu_custom_call.1} parent=1 // pred_region
      %92 = dma.done [#allocation3], 128
    $region41: #{tpu_custom_call.1} parent=1 // pred_fallthru
      _
    // Predicated region
    $region42: #{tpu_custom_call.1} parent=1 // pred_check
      _
    $region43: #{tpu_custom_call.1} parent=1 // pred_check_branch
      %94 = sbr.rel (0) target = $region45
    $region44: #{tpu_custom_call.1} parent=1 // pred_region
      %96 = dma.done [#allocation6], 512
    $region45: #{tpu_custom_call.1} parent=1 // pred_fallthru
      _
    // Predicated region
    $region46: #{tpu_custom_call.1} parent=1 // pred_check
      _
    $region47: #{tpu_custom_call.1} parent=1 // pred_check_branch
      %98 = sbr.rel (0) target = $region49
    $region48: #{tpu_custom_call.1} parent=1 // pred_region
      %100 = dma.done [#allocation6], 1024
    $region49: #{tpu_custom_call.1} parent=1 // pred_fallthru
      _
    // Predicated region
    $region50: #{tpu_custom_call.1} parent=1 // pred_check
      _
    $region51: #{tpu_custom_call.1} parent=1 // pred_check_branch
      %102 = sbr.rel (0) target = $region53
    $region52: #{tpu_custom_call.1} parent=1 // pred_region
      %104 = dma.done [#allocation9], 1024
    $region53: #{tpu_custom_call.1} parent=1 // pred_fallthru
      _
    // Predicated region
    $region54: #{tpu_custom_call.1} parent=1 // pred_check
      _
    $region55: #{tpu_custom_call.1} parent=1 // pred_check_branch
      %106 = sbr.rel (0) target = $region57
    $region56: #{tpu_custom_call.1} parent=1 // pred_region
      %108 = dma.done [#allocation9], 1024
    $region57: #{tpu_custom_call.1} parent=1 // pred_fallthru
      _
    %v110 = vld [vmem:[#allocation2] sm:$0xff]
    %v111 = vpack.c.bf16 %v110, %v110
    %v112 = vld [vmem:[#allocation5] sm:$0xf]
    %v113 = vld [vmem:[#allocation5 + $0x4] sm:$0xf]
    %v114 = vld [vmem:[#allocation5 + $0x8] sm:$0xf]
    %v115 = vld [vmem:[#allocation5 + $0xc] sm:$0xf]
    %v116 = vld [vmem:[#allocation5 + $0x10] sm:$0xf]
    %v117 = vld [vmem:[#allocation5 + $0x14] sm:$0xf]
    %v118 = vld [vmem:[#allocation5 + $0x18] sm:$0xf]
    %v119 = vld [vmem:[#allocation5 + $0x1c] sm:$0xf]
    %v120 = vld [vmem:[%s2] sm:$0x1]
    %v122 = vperm.slane %v120, 0
    %v132 = vunpack.c.l.b16 %v112
    %v133 = vunpack.c.l.b16 %v113
    %v134 = vunpack.c.l.b16 %v114
    %v135 = vunpack.c.l.b16 %v115
    %v136 = vunpack.c.l.b16 %v116
    %v137 = vunpack.c.l.b16 %v117
    %v138 = vunpack.c.l.b16 %v118
    %v139 = vunpack.c.l.b16 %v119
    %v140 = vpack.c.b16 %v133, %v132
    %v141 = vpack.c.b16 %v135, %v134
    %v142 = vpack.c.b16 %v137, %v136
    %v143 = vpack.c.b16 %v139, %v138
    %vm148 = vcmask 523264
    %v150 = vsel %vm148, %v111, 0
    %152 = vmatpush.bf16.msra.mxu0 0
    %153 = vmatpush.bf16.msra.mxu0 0
    %154 = vmatpush.bf16.msra.mxu0 0
    %155 = vmatpush.bf16.msra.mxu0 0
    %156 = vmatpush.bf16.msra.mxu0 %v143
    %157 = vmatpush.bf16.msra.mxu0 %v142
    %158 = vmatpush.bf16.msra.mxu0 %v141
    %159 = vmatpush.bf16.msra.mxu0 %v140
    %160 = vmatmul.bf16.gmra.mxu0 %v150
    %v161 = vpop.f32.mrf.mxu0
    %v162 = vadd.f32 %v122, %v161
    %v163 = vpop.f32.mrf.mxu0
    %164 = vdwg.mxu0
    %v165 = vmax.f32 %v162, 0.0
    %v166 = vpack.c.bf16 %v165, %v165
    %v167 = vld [vmem:[#allocation7] sm:$0xf]
    %v168 = vld [vmem:[#allocation7 + $0x4] sm:$0xf]
    %v169 = vld [vmem:[#allocation7 + $0x8] sm:$0xf]
    %v170 = vld [vmem:[#allocation7 + $0xc] sm:$0xf]
    %v171 = vld [vmem:[#allocation7 + $0x10] sm:$0xf]
    %v172 = vld [vmem:[#allocation7 + $0x14] sm:$0xf]
    %v173 = vld [vmem:[#allocation7 + $0x18] sm:$0xf]
    %v174 = vld [vmem:[#allocation7 + $0x1c] sm:$0xf]
    %v175 = vld [vmem:[#allocation7 + $0x20] sm:$0xf]
    %v176 = vld [vmem:[#allocation7 + $0x24] sm:$0xf]
    %v177 = vld [vmem:[#allocation7 + $0x28] sm:$0xf]
    %v178 = vld [vmem:[#allocation7 + $0x2c] sm:$0xf]
    %v179 = vld [vmem:[#allocation7 + $0x30] sm:$0xf]
    %v180 = vld [vmem:[#allocation7 + $0x34] sm:$0xf]
    %v181 = vld [vmem:[#allocation7 + $0x38] sm:$0xf]
    %v182 = vld [vmem:[#allocation7 + $0x3c] sm:$0xf]
    %v183 = vld [vmem:[%s4] sm:$0x1]
    %v185 = vperm.slane %v183, 0
    %v203 = vunpack.c.l.b16 %v167
    %v204 = vunpack.c.l.b16 %v168
    %v205 = vunpack.c.l.b16 %v169
    %v206 = vunpack.c.l.b16 %v170
    %v207 = vunpack.c.l.b16 %v171
    %v208 = vunpack.c.l.b16 %v172
    %v209 = vunpack.c.l.b16 %v173
    %v210 = vunpack.c.l.b16 %v174
    %v211 = vunpack.c.l.b16 %v175
    %v212 = vunpack.c.l.b16 %v176
    %v213 = vunpack.c.l.b16 %v177
    %v214 = vunpack.c.l.b16 %v178
    %v215 = vunpack.c.l.b16 %v179
    %v216 = vunpack.c.l.b16 %v180
    %v217 = vunpack.c.l.b16 %v181
    %v218 = vunpack.c.l.b16 %v182
    %v219 = vpack.c.b16 %v204, %v203
    %v220 = vpack.c.b16 %v206, %v205
    %v221 = vpack.c.b16 %v208, %v207
    %v222 = vpack.c.b16 %v210, %v209
    %v223 = vpack.c.b16 %v212, %v211
    %v224 = vpack.c.b16 %v214, %v213
    %v225 = vpack.c.b16 %v216, %v215
    %v226 = vpack.c.b16 %v218, %v217
    %235 = vmatpush.bf16.msra.mxu0 %v226
    %236 = vmatpush.bf16.msra.mxu0 %v225
    %237 = vmatpush.bf16.msra.mxu0 %v224
    %238 = vmatpush.bf16.msra.mxu0 %v223
    %239 = vmatpush.bf16.msra.mxu0 %v222
    %240 = vmatpush.bf16.msra.mxu0 %v221
    %241 = vmatpush.bf16.msra.mxu0 %v220
    %242 = vmatpush.bf16.msra.mxu0 %v219
    %243 = vmatmul.bf16.gmra.mxu0 %v166
    %v244 = vpop.f32.mrf.mxu0
    %v245 = vadd.f32 %v185, %v244
    %v246 = vpop.f32.mrf.mxu0
    %247 = vdwg.mxu0
    %v248 = vmax.f32 %v245, 0.0
    %v249 = vpack.c.bf16 %v248, %v248
    %v250 = vld [vmem:[#allocation8] sm:$0xf]
    %v251 = vld [vmem:[#allocation8 + $0x4] sm:$0xf]
    %v252 = vld [vmem:[#allocation8 + $0x8] sm:$0xf]
    %v253 = vld [vmem:[#allocation8 + $0xc] sm:$0xf]
    %v254 = vld [vmem:[#allocation8 + $0x10] sm:$0xf]
    %v255 = vld [vmem:[#allocation8 + $0x14] sm:$0xf]
    %v256 = vld [vmem:[#allocation8 + $0x18] sm:$0xf]
    %v257 = vld [vmem:[#allocation8 + $0x1c] sm:$0xf]
    %v258 = vld [vmem:[#allocation8 + $0x20] sm:$0xf]
    %v259 = vld [vmem:[#allocation8 + $0x24] sm:$0xf]
    %v260 = vld [vmem:[#allocation8 + $0x28] sm:$0xf]
    %v261 = vld [vmem:[#allocation8 + $0x2c] sm:$0xf]
    %v262 = vld [vmem:[#allocation8 + $0x30] sm:$0xf]
    %v263 = vld [vmem:[#allocation8 + $0x34] sm:$0xf]
    %v264 = vld [vmem:[#allocation8 + $0x38] sm:$0xf]
    %v265 = vld [vmem:[#allocation8 + $0x3c] sm:$0xf]
    %v266 = vld [vmem:[%s6] sm:$0x1]
    %v268 = vperm.slane %v266, 0
    %v286 = vunpack.c.l.b16 %v250
    %v287 = vunpack.c.l.b16 %v251
    %v288 = vunpack.c.l.b16 %v252
    %v289 = vunpack.c.l.b16 %v253
    %v290 = vunpack.c.l.b16 %v254
    %v291 = vunpack.c.l.b16 %v255
    %v292 = vunpack.c.l.b16 %v256
    %v293 = vunpack.c.l.b16 %v257
    %v294 = vunpack.c.l.b16 %v258
    %v295 = vunpack.c.l.b16 %v259
    %v296 = vunpack.c.l.b16 %v260
    %v297 = vunpack.c.l.b16 %v261
    %v298 = vunpack.c.l.b16 %v262
    %v299 = vunpack.c.l.b16 %v263
    %v300 = vunpack.c.l.b16 %v264
    %v301 = vunpack.c.l.b16 %v265
    %v302 = vpack.c.b16 %v287, %v286
    %v303 = vpack.c.b16 %v289, %v288
    %v304 = vpack.c.b16 %v291, %v290
    %v305 = vpack.c.b16 %v293, %v292
    %v306 = vpack.c.b16 %v295, %v294
    %v307 = vpack.c.b16 %v297, %v296
    %v308 = vpack.c.b16 %v299, %v298
    %v309 = vpack.c.b16 %v301, %v300
    %318 = vmatpush.bf16.msra.mxu0 %v309
    %319 = vmatpush.bf16.msra.mxu0 %v308
    %320 = vmatpush.bf16.msra.mxu0 %v307
    %321 = vmatpush.bf16.msra.mxu0 %v306
    %322 = vmatpush.bf16.msra.mxu0 %v305
    %323 = vmatpush.bf16.msra.mxu0 %v304
    %324 = vmatpush.bf16.msra.mxu0 %v303
    %325 = vmatpush.bf16.msra.mxu0 %v302
    %326 = vmatmul.bf16.gmra.mxu0 %v249
    %v327 = vpop.f32.mrf.mxu0
    %v328 = vadd.f32 %v268, %v327
    %v329 = vpop.f32.mrf.mxu0
    %330 = vdwg.mxu0
    %v331 = vmax.f32 %v328, 0.0
    %v332 = vpack.c.bf16 %v331, %v331
    %v333 = vld [vmem:[#allocation10] sm:$0xf]
    %v334 = vld [vmem:[#allocation10 + $0x4] sm:$0xf]
    %v335 = vld [vmem:[#allocation10 + $0x8] sm:$0xf]
    %v336 = vld [vmem:[#allocation10 + $0xc] sm:$0xf]
    %v337 = vld [vmem:[#allocation10 + $0x10] sm:$0xf]
    %v338 = vld [vmem:[#allocation10 + $0x14] sm:$0xf]
    %v339 = vld [vmem:[#allocation10 + $0x18] sm:$0xf]
    %v340 = vld [vmem:[#allocation10 + $0x1c] sm:$0xf]
    %v341 = vld [vmem:[#allocation10 + $0x20] sm:$0xf]
    %v342 = vld [vmem:[#allocation10 + $0x24] sm:$0xf]
    %v343 = vld [vmem:[#allocation10 + $0x28] sm:$0xf]
    %v344 = vld [vmem:[#allocation10 + $0x2c] sm:$0xf]
    %v345 = vld [vmem:[#allocation10 + $0x30] sm:$0xf]
    %v346 = vld [vmem:[#allocation10 + $0x34] sm:$0xf]
    %v347 = vld [vmem:[#allocation10 + $0x38] sm:$0xf]
    %v348 = vld [vmem:[#allocation10 + $0x3c] sm:$0xf]
    %v349 = vld [vmem:[%s8] sm:$0x1]
    %v351 = vperm.slane %v349, 0
    %v369 = vunpack.c.l.b16 %v333
    %v370 = vunpack.c.l.b16 %v334
    %v371 = vunpack.c.l.b16 %v335
    %v372 = vunpack.c.l.b16 %v336
    %v373 = vunpack.c.l.b16 %v337
    %v374 = vunpack.c.l.b16 %v338
    %v375 = vunpack.c.l.b16 %v339
    %v376 = vunpack.c.l.b16 %v340
    %v377 = vunpack.c.l.b16 %v341
    %v378 = vunpack.c.l.b16 %v342
    %v379 = vunpack.c.l.b16 %v343
    %v380 = vunpack.c.l.b16 %v344
    %v381 = vunpack.c.l.b16 %v345
    %v382 = vunpack.c.l.b16 %v346
    %v383 = vunpack.c.l.b16 %v347
    %v384 = vunpack.c.l.b16 %v348
    %v385 = vpack.c.b16 %v370, %v369
    %v386 = vpack.c.b16 %v372, %v371
    %v387 = vpack.c.b16 %v374, %v373
    %v388 = vpack.c.b16 %v376, %v375
    %v389 = vpack.c.b16 %v378, %v377
    %v390 = vpack.c.b16 %v380, %v379
    %v391 = vpack.c.b16 %v382, %v381
    %v392 = vpack.c.b16 %v384, %v383
    %401 = vmatpush.bf16.msra.mxu0 %v392
    %402 = vmatpush.bf16.msra.mxu0 %v391
    %403 = vmatpush.bf16.msra.mxu0 %v390
    %404 = vmatpush.bf16.msra.mxu0 %v389
    %405 = vmatpush.bf16.msra.mxu0 %v388
    %406 = vmatpush.bf16.msra.mxu0 %v387
    %407 = vmatpush.bf16.msra.mxu0 %v386
    %408 = vmatpush.bf16.msra.mxu0 %v385
    %409 = vmatmul.bf16.gmra.mxu0 %v332
    %v410 = vpop.f32.mrf.mxu0
    %v411 = vadd.f32 %v351, %v410
    %v412 = vpop.f32.mrf.mxu0
    %413 = vdwg.mxu0
    %414 = vst [vmem:[#allocation11] sm:$0xff] %v411
    // Predicated region
    $region58: #{tpu_custom_call.1} parent=1 // pred_check
      _
    $region59: #{tpu_custom_call.1} parent=1 // pred_check_branch
      %416 = sbr.rel (0) target = $region61
    $region60: #{tpu_custom_call.1} parent=1 // pred_region
      %418 = vsyncadd [#allocation4], 0
      %s420 = sshll.u32 [#allocation11], 4
      %s421 = int_to_ptr.vmem [resolvable:$true] %s420
      %s422 = sshll.u32 %s9, 4
      %s423 = int_to_ptr.hbm [resolvable:$true] %s422
      %425 = dma.vmem_to_hbm [thread:$0]  %s421, 128, %s423, [#allocation4]
    $region61: #{tpu_custom_call.1} parent=1 // pred_fallthru
      _
    // Predicated region
    $region62: #{tpu_custom_call.1} parent=1 // pred_check
      _
    $region63: #{tpu_custom_call.1} parent=1 // pred_check_branch
      %427 = sbr.rel (0) target = $region65
    $region64: #{tpu_custom_call.1} parent=1 // pred_region
      %429 = dma.done [#allocation4], 128
    $region65: #{tpu_custom_call.1} parent=1 // pred_fallthru
      _
    %430 = vsyncpa [#allocation3], 1
    %431 = vsyncpa [#allocation6], 1
    %432 = vsyncpa [#allocation9], 1
    %433 = vsyncpa [#allocation4], 1

</llo_original>
